<compile_context>
chip_gen: v7x
topology: tpu7x:2x2x1
jax: 0.10.0
libtpu: 0.0.40
codegen_flags: <defaults>
</compile_context>

<pallas_src>
import functools

import jax
import jax.numpy as jnp
import numpy as np
from jax import lax
from jax.experimental import pallas as pl
from jax.experimental.pallas import tpu as pltpu


def _partial_kernel(x_ref, t_ref, out_ref, *, hw, tiles_per_split, ignore_index):
    """One (image, pixel-split, pixel-tile) grid cell.

    x_ref:   (1, C, T) logits tile (native dtype; upcast to f32 in-kernel)
    t_ref:   (1, 1, T) integer label tile (int16/int32; widened in-kernel)
    out_ref: (1, 1, C, 3) f32 partials accumulated across the pixel-tile axis:
               [:, 0] histogram counts (all in-range labels; matches np.histogram)
               [:, 1] valid counts     (label != ignore_index) -> NLL denominator
               [:, 2] sum over valid pixels of that class of -log p(target)
    """
    s_idx = pl.program_id(1)
    j = pl.program_id(2)

    @pl.when(j == 0)
    def _():
        out_ref[...] = jnp.zeros_like(out_ref)

    x = x_ref[0].astype(jnp.float32)          # (C, T)
    t = t_ref[0].astype(jnp.int32)            # (1, T)
    C, T = x.shape

    # Logical pixel offset of this tile.  The index_map clamps the DMA to the
    # last real block, so ragged-tail / clamped-duplicate lanes are masked here
    # (jnp.where select) instead of padding the logits in HBM.
    start = (s_idx * tiles_per_split + j) * T
    lane = lax.broadcasted_iota(jnp.int32, (1, T), 1)
    in_bounds = (start + lane) < hw                                     # (1, T)

    t_eff = jnp.where(in_bounds, t, -1)          # out-of-range lanes match no class
    valid = jnp.logical_and(in_bounds, t != ignore_index)               # (1, T)

    cls = lax.broadcasted_iota(jnp.int32, (C, 1), 0)
    onehot = cls == t_eff                                               # (C, T) bool
    onehot_f = onehot.astype(jnp.float32)

    # Per-pixel log-sum-exp over the class (sublane) axis and the selected logit.
    m = jnp.max(x, axis=0, keepdims=True)                               # (1, T)
    lse = jnp.log(jnp.sum(jnp.exp(x - m), axis=0, keepdims=True)) + m   # (1, T)
    x_t = jnp.sum(jnp.where(onehot, x, 0.0), axis=0, keepdims=True)     # (1, T)
    # select (not multiply) so NaN/Inf in masked lanes cannot propagate.
    nll = jnp.where(valid, lse - x_t, 0.0)                              # (1, T)

    # Per-class pixel reductions on the otherwise idle MXU:
    #   (C, T) . (3, T)^T -> (C, 3) = [hist counts, valid counts, sum nll]
    rows = jnp.concatenate(
        [jnp.ones((1, T), jnp.float32), valid.astype(jnp.float32), nll], axis=0)
    partial = lax.dot_general(
        onehot_f, rows,
        dimension_numbers=(((1,), (1,)), ((), ())),
        preferred_element_type=jnp.float32)                             # (C, 3)

    out_ref[0, 0] += partial


def _vmem_budget():
    """Generation-aware VMEM limits (v7x has 64 MiB vs 128 MiB on v5e/v6e)."""
    try:
        cap = int(pltpu.get_tpu_info().vmem_capacity_bytes)
    except Exception:
        cap = 64 * 1024 * 1024           # conservative (v7x-sized) fallback
    vmem_limit = min(cap - (8 << 20), int(cap * 0.8))
    tile_budget = int(vmem_limit * 0.7)  # slack for Mosaic-managed temporaries
    return vmem_limit, tile_budget


def _choose_tile_pixels(num_classes, hw, x_itemsize, t_itemsize, tile_budget_bytes,
                        max_lanes=128 * 1024):
    """Largest lane-dim pixel tile whose DMA blocks + f32 temporaries fit the budget."""
    if hw < 128:
        return hw                         # single full-extent lane block
    c_pad = -(-num_classes // 8) * 8
    per_lane = (2 * num_classes * x_itemsize   # double-buffered logits block (native dtype)
                + 2 * t_itemsize               # double-buffered target block
                + 8 * c_pad * 4                # live f32 (C, T) intermediates (estimate)
                + 16 * 4)                      # (1..3, T) f32 row temporaries
    t = int(tile_budget_bytes) // per_lane
    t = max(512, min(t, max_lanes))
    t = (t // 128) * 128
    return min(t, (hw // 128) * 128)


def image_based_cross_entropy_loss_2d(inputs, targets, num_classes,
                                      upper_bound=1.0, norm=False, ignore_index=255,
                                      tile_pixels=None, pixel_splits=None):
    """inputs: (N, C, H, W) logits; targets: (N, H, W) int labels. Returns scalar loss."""
    N, C, H, W = inputs.shape
    if C != num_classes:
        raise ValueError(f"num_classes={num_classes} must match channel dim {C}")
    HW = H * W

    # Logits stay in their native dtype for the HBM->VMEM DMA (upcast in-kernel).
    x = inputs.reshape(N, C, HW)

    # Shrink the label stream: int16 when the values fit (few-% HBM win at small C).
    t = targets
    if not jnp.issubdtype(t.dtype, jnp.integer):
        t = t.astype(jnp.int32)
    use_i16 = (num_classes < 2 ** 15) and (-2 ** 15 <= int(ignore_index) < 2 ** 15)
    t = t.astype(jnp.int16 if use_i16 else jnp.int32).reshape(N, 1, HW)

    vmem_limit, tile_budget = _vmem_budget()
    if tile_pixels is None:
        tile_pixels = _choose_tile_pixels(C, HW, jnp.dtype(x.dtype).itemsize,
                                          jnp.dtype(t.dtype).itemsize, tile_budget)
    T = int(tile_pixels)
    n_blocks = -(-HW // T)
    last_block = n_blocks - 1

    # Megacore (v7x): if the batch alone cannot feed two cores, split the pixel
    # range into independent parallel partials; finalize happens in the wrapper.
    if pixel_splits is None:
        pixel_splits = 2 if N == 1 else 1
    S = max(1, min(int(pixel_splits), n_blocks))
    tiles_per_split = -(-n_blocks // S)

    def in_index_map(i, s, j):
        # Clamp to the last real block; out-of-range lanes are masked in-kernel.
        return (i, 0, jnp.minimum(s * tiles_per_split + j, last_block))

    kernel = functools.partial(_partial_kernel, hw=HW,
                               tiles_per_split=tiles_per_split,
                               ignore_index=int(ignore_index))

    partials = pl.pallas_call(
        kernel,
        out_shape=jax.ShapeDtypeStruct((N, S, C, 3), jnp.float32),
        grid_spec=pltpu.PrefetchScalarGridSpec(
            num_scalar_prefetch=0,
            grid=(N, S, tiles_per_split),
            in_specs=[
                pl.BlockSpec((1, C, T), in_index_map),
                pl.BlockSpec((1, 1, T), in_index_map),
            ],
            out_specs=pl.BlockSpec((1, 1, C, 3), lambda i, s, j: (i, s, 0, 0)),
        ),
        compiler_params=pltpu.CompilerParams(
            dimension_semantics=("parallel", "parallel", "arbitrary"),
            vmem_limit_bytes=int(vmem_limit),
        ),
    )(x, t)

    # Tiny per-image finalize (C*3 numbers per image) in plain JAX / f32.
    acc = jnp.sum(partials, axis=1)                               # (N, C, 3)
    hist_counts, counts, s_sum = acc[..., 0], acc[..., 1], acc[..., 2]
    total = jnp.sum(hist_counts, axis=1, keepdims=True)           # (N, 1)
    hist = hist_counts / jnp.maximum(total, 1.0)                  # density (unit bins)
    present = (hist > 0).astype(jnp.float32)
    if norm:
        weight = present * upper_bound / jnp.where(hist > 0, hist, 1.0) + 1.0
    else:
        weight = present * upper_bound * (1.0 - hist) + 1.0       # (N, C)
    num = jnp.sum(weight * s_sum, axis=1)
    den = jnp.sum(weight * counts, axis=1)
    per_image = jnp.where(den > 0, num / jnp.maximum(den, 1.0), 0.0)  # guard all-ignored
    return jnp.sum(per_image)


def _reference_loss(inputs, targets, num_classes, upper_bound=1.0, norm=False, ignore_index=255):
    """Pure numpy reference mirroring the PyTorch module."""
    inputs = np.asarray(inputs, dtype=np.float32)
    targets = np.asarray(targets)
    N, C, H, W = inputs.shape
    total = 0.0
    for i in range(N):
        x = inputs[i].reshape(C, -1)
        t = targets[i].reshape(-1)
        m = x.max(axis=0, keepdims=True)
        logp = x - (np.log(np.exp(x - m).sum(axis=0, keepdims=True)) + m)
        hist = np.histogram(t, bins=range(num_classes + 1), density=True)[0]
        if norm:
            weight = (hist != 0) * upper_bound * (1.0 / np.where(hist != 0, hist, 1.0)) + 1
        else:
            weight = (hist != 0) * upper_bound * (1 - hist) + 1
        valid = t != ignore_index
        tc = np.clip(t, 0, C - 1)
        w_pix = weight[tc] * valid
        picked = logp[tc, np.arange(t.size)]
        total += np.sum(w_pix * -picked) / np.sum(w_pix)
    return np.float32(total)


if __name__ == "__main__":
    key = jax.random.PRNGKey(0)
    k1, k2, k3 = jax.random.split(key, 3)

    N, C, H, W = 2, 4, 16, 16
    inputs = jax.random.normal(k1, (N, C, H, W), dtype=jnp.float32)
    targets = jax.random.randint(k2, (N, H, W), 0, C, dtype=jnp.int32)
    # sprinkle some ignore_index pixels
    ignore_mask = jax.random.uniform(k3, (N, H, W)) < 0.1
    targets = jnp.where(ignore_mask, 255, targets)

    loss = image_based_cross_entropy_loss_2d(inputs, targets, num_classes=C)
    loss = jax.block_until_ready(loss)

    ref = _reference_loss(inputs, targets, num_classes=C)
    assert np.isfinite(float(loss)), float(loss)
    assert np.allclose(float(loss), float(ref), rtol=1e-3, atol=1e-3), (float(loss), float(ref))

    print("KERNEL_OK")
</pallas_src>

<mosaic_0001>
module attributes {stable_mosaic.version = 11 : i64} {
  func.func @_partial_kernel(%arg0: i32, %arg1: i32, %arg2: i32, %arg3: memref<1x4x256xf32, #tpu.memory_space<vmem>>, %arg4: memref<1x1x256xi16, #tpu.memory_space<vmem>>, %arg5: memref<1x1x4x3xf32, #tpu.memory_space<vmem>>) attributes {dimension_semantics = [#tpu.dimension_semantics<parallel>, #tpu.dimension_semantics<parallel>, #tpu.dimension_semantics<arbitrary>], iteration_bounds = array<i64: 2, 1, 1>, scalar_prefetch = 0 : i64, scratch_operands = 0 : i64, tpu.core_type = #tpu.core_type<tc>, window_params = [{transform_indices = @transform_0, window_bounds = array<i64: 1, 4, 256>}, {transform_indices = @transform_1, window_bounds = array<i64: 1, 1, 256>}, {transform_indices = @transform_2, window_bounds = array<i64: 1, 1, 4, 3>}]} {
    %c0_i32 = arith.constant 0 : i32
    %0 = arith.cmpi eq, %arg2, %c0_i32 : i32
    %1 = arith.extui %0 : i1 to i32
    %c0_i32_0 = arith.constant 0 : i32
    %2 = arith.cmpi ne, %1, %c0_i32_0 : i32
    scf.if %2 {
      %cst_21 = arith.constant 0.000000e+00 : f32
      %54 = vector.broadcast %cst_21 : f32 to vector<1x1x4x3xf32>
      %c0_22 = arith.constant 0 : index
      %c0_23 = arith.constant 0 : index
      %c0_24 = arith.constant 0 : index
      %c0_25 = arith.constant 0 : index
      %55 = vector.load %arg5[%c0_22, %c0_23, %c0_24, %c0_25] : memref<1x1x4x3xf32, #tpu.memory_space<vmem>>, vector<1x1x4x3xf32>
      tpu.vector_store %arg5[%c0_22, %c0_23, %c0_24, %c0_25], %54 {strides = array<i32>} : memref<1x1x4x3xf32, #tpu.memory_space<vmem>>, vector<1x1x4x3xf32>,
    } else {
    }
    %c0 = arith.constant 0 : index
    %c0_1 = arith.constant 0 : index
    %c0_2 = arith.constant 0 : index
    %3 = vector.load %arg3[%c0, %c0_1, %c0_2] : memref<1x4x256xf32, #tpu.memory_space<vmem>>, vector<1x4x256xf32>
    %4 = vector.shape_cast %3 : vector<1x4x256xf32> to vector<4x256xf32>
    %c0_3 = arith.constant 0 : index
    %c0_4 = arith.constant 0 : index
    %c0_5 = arith.constant 0 : index
    %5 = vector.load %arg4[%c0_3, %c0_4, %c0_5] : memref<1x1x256xi16, #tpu.memory_space<vmem>>, vector<1x1x256xi16>
    %6 = vector.shape_cast %5 : vector<1x1x256xi16> to vector<1x256xi16>
    %7 = arith.extsi %6 : vector<1x256xi16> to vector<1x256xi32>
    %c1_i32 = arith.constant 1 : i32
    %8 = arith.muli %arg1, %c1_i32 : i32
    %9 = arith.addi %8, %arg2 : i32
    %c256_i32 = arith.constant 256 : i32
    %10 = arith.muli %9, %c256_i32 : i32
    %11 = tpu.iota {dimensions = array<i32: 1>} : vector<1x256xi32>
    %12 = vector.broadcast %10 : i32 to vector<1x256xi32>
    %13 = arith.addi %12, %11 : vector<1x256xi32>
    %c256_i32_6 = arith.constant 256 : i32
    %14 = vector.broadcast %c256_i32_6 : i32 to vector<1x256xi32>
    %15 = arith.cmpi slt, %13, %14 : vector<1x256xi32>
    %c-1_i32 = arith.constant -1 : i32
    %16 = vector.broadcast %c-1_i32 : i32 to vector<1x256xi32>
    %17 = arith.select %15, %7, %16 : vector<1x256xi1>, vector<1x256xi32>
    %c255_i32 = arith.constant 255 : i32
    %18 = vector.broadcast %c255_i32 : i32 to vector<1x256xi32>
    %19 = arith.cmpi ne, %7, %18 : vector<1x256xi32>
    %20 = arith.andi %15, %19 : vector<1x256xi1>
    %21 = tpu.iota {dimensions = array<i32: 0>} : vector<4x1xi32>
    %22 = vector.broadcast %21 : vector<4x1xi32> to vector<4x256xi32>
    %23 = vector.broadcast %17 : vector<1x256xi32> to vector<4x256xi32>
    %24 = arith.cmpi eq, %22, %23 : vector<4x256xi32>
    %25 = arith.extui %24 : vector<4x256xi1> to vector<4x256xi32>
    %26 = arith.sitofp %25 : vector<4x256xi32> to vector<4x256xf32>
    %cst = arith.constant dense<0xFF800000> : vector<256xf32>
    %27 = vector.multi_reduction <maximumf>, %4, %cst [0] : vector<4x256xf32> to vector<256xf32>
    %28 = vector.shape_cast %27 : vector<256xf32> to vector<1x256xf32>
    %29 = vector.broadcast %28 : vector<1x256xf32> to vector<4x256xf32>
    %30 = arith.subf %4, %29 : vector<4x256xf32>
    %31 = math.exp %30 : vector<4x256xf32>
    %cst_7 = arith.constant dense<0.000000e+00> : vector<256xf32>
    %32 = vector.multi_reduction <add>, %31, %cst_7 [0] : vector<4x256xf32> to vector<256xf32>
    %33 = vector.shape_cast %32 : vector<256xf32> to vector<1x256xf32>
    %34 = math.log %33 : vector<1x256xf32>
    %35 = arith.addf %34, %28 : vector<1x256xf32>
    %cst_8 = arith.constant 0.000000e+00 : f32
    %36 = vector.broadcast %cst_8 : f32 to vector<4x256xf32>
    %37 = arith.select %24, %4, %36 : vector<4x256xi1>, vector<4x256xf32>
    %cst_9 = arith.constant dense<0.000000e+00> : vector<256xf32>
    %38 = vector.multi_reduction <add>, %37, %cst_9 [0] : vector<4x256xf32> to vector<256xf32>
    %39 = vector.shape_cast %38 : vector<256xf32> to vector<1x256xf32>
    %40 = arith.subf %35, %39 : vector<1x256xf32>
    %cst_10 = arith.constant 0.000000e+00 : f32
    %41 = vector.broadcast %cst_10 : f32 to vector<1x256xf32>
    %42 = arith.select %20, %40, %41 : vector<1x256xi1>, vector<1x256xf32>
    %cst_11 = arith.constant 1.000000e+00 : f32
    %43 = vector.broadcast %cst_11 : f32 to vector<1x256xf32>
    %44 = arith.extui %20 : vector<1x256xi1> to vector<1x256xi32>
    %45 = arith.sitofp %44 : vector<1x256xi32> to vector<1x256xf32>
    %46 = tpu.concatenate %43, %45, %42 in 0 : vector<1x256xf32>, vector<1x256xf32>, vector<1x256xf32> -> vector<3x256xf32>
    %cst_12 = arith.constant dense<0.000000e+00> : vector<4x3xf32>
    %47 = tpu.matmul %26, %46, %cst_12 {dimension_numbers = #tpu.dot_dimension_numbers<[1], [1], [0], [0], [0, 0, 1, 0], [], []>} : vector<4x256xf32>, vector<3x256xf32>, vector<4x3xf32> -> vector<4x3xf32>
    %c0_13 = arith.constant 0 : index
    %c0_14 = arith.constant 0 : index
    %c0_15 = arith.constant 0 : index
    %c0_16 = arith.constant 0 : index
    %48 = vector.load %arg5[%c0_13, %c0_14, %c0_15, %c0_16] : memref<1x1x4x3xf32, #tpu.memory_space<vmem>>, vector<1x1x4x3xf32>
    %49 = vector.shape_cast %48 : vector<1x1x4x3xf32> to vector<4x3xf32>
    %50 = arith.addf %49, %47 : vector<4x3xf32>
    %c0_17 = arith.constant 0 : index
    %c0_18 = arith.constant 0 : index
    %c0_19 = arith.constant 0 : index
    %c0_20 = arith.constant 0 : index
    %51 = vector.load %arg5[%c0_17, %c0_18, %c0_19, %c0_20] : memref<1x1x4x3xf32, #tpu.memory_space<vmem>>, vector<1x1x4x3xf32>
    %52 = vector.shape_cast %51 : vector<1x1x4x3xf32> to vector<4x3xf32>
    %53 = vector.shape_cast %50 : vector<4x3xf32> to vector<1x1x4x3xf32>
    tpu.vector_store %arg5[%c0_17, %c0_18, %c0_19, %c0_20], %53 {strides = array<i32>} : memref<1x1x4x3xf32, #tpu.memory_space<vmem>>, vector<1x1x4x3xf32>,
    return
  }
  func.func @transform_0(%arg0: i32, %arg1: i32, %arg2: i32) -> (i32, i32, i32) {
    %c1_i32 = arith.constant 1 : i32
    %0 = arith.muli %arg1, %c1_i32 : i32
    %1 = arith.addi %0, %arg2 : i32
    %c0_i32 = arith.constant 0 : i32
    %2 = arith.minsi %1, %c0_i32 : i32
    %c0_i32_0 = arith.constant 0 : i32
    %c0_i32_1 = arith.constant 0 : i32
    return %arg0, %c0_i32_0, %2 : i32, i32, i32
  }
  func.func @transform_1(%arg0: i32, %arg1: i32, %arg2: i32) -> (i32, i32, i32) {
    %c1_i32 = arith.constant 1 : i32
    %0 = arith.muli %arg1, %c1_i32 : i32
    %1 = arith.addi %0, %arg2 : i32
    %c0_i32 = arith.constant 0 : i32
    %2 = arith.minsi %1, %c0_i32 : i32
    %c0_i32_0 = arith.constant 0 : i32
    %c0_i32_1 = arith.constant 0 : i32
    return %arg0, %c0_i32_0, %2 : i32, i32, i32
  }
  func.func @transform_2(%arg0: i32, %arg1: i32, %arg2: i32) -> (i32, i32, i32, i32) {
    %c0_i32 = arith.constant 0 : i32
    %c0_i32_0 = arith.constant 0 : i32
    %c0_i32_1 = arith.constant 0 : i32
    return %arg0, %arg1, %c0_i32, %c0_i32_0 : i32, i32, i32, i32
  }
}

</mosaic_0001>

<llo_original>
// kernel: tpu_custom_call.1
$region0: #{tpu_custom_call.1}
  #allocation0 [shape = 'u32[]', space=smem, size = 0x4, offset = 0x4, fixed_abs, tag = 'smem constant byte address 0x4 - core index']
  #allocation1 [shape = 'u32[144,128]{1,0:T(1,128)}', space=vmem, size = 0x12000, scoped, tag = 'internal scratch']
  %s0 = inlined_call_operand.hbm [shape: f32[2,4,256], index: 0, kind: input, shape index: {}]
  %s1 = inlined_call_operand.vmem [shape: s16[2,1,256], index: 1, kind: input, shape index: {}]
  %s2 = inlined_call_operand.vmem [shape: f32[2,1,4,3], index: 2, kind: output, shape index: {}]
  %s3 = sld [smem:[#allocation0]]
  $region49: #{tpu_custom_call.1} parent=0
    _
  %s5 = ssub.s32 1, %s3
  %s6 = scalar_select 0, %s5, %s3
  $region1: #{tpu_custom_call.1} parent=0
    #allocation2 [shape = 'u8[8192]{0}', space=vmem, size = 0x2000, scoped, tag = 'input window, operand 0']
    #allocation3 [shape = 's32[2]{0}', space=sflag, size = 0x8, scoped, tag = 'scoped memory for tpu_custom_call.1']
    %7 = vsyncpa [#allocation3], 0
    %s8 = scalar_lea.sflag [#allocation3], 1
    %9 = vsyncpa %s8, 0
    loop: start=0, step=1, limit=4
    $region2: #{tpu_custom_call.1} parent=1 // loop_pre_header
      _
    $region3: #{tpu_custom_call.1} parent=1 // loop_header
      %s11 = sphi 0, %s15
      %p12 = scmp.ge.s32.totalorder %s11, 4
      %s18 = sphi 0, %s37
      %s19 = sphi 0, %s33
      %s20 = sphi 0, %s29
      %s21 = sphi 0, %s18
      %s22 = sphi 0, %s19
      %s23 = sphi 0, %s20
      %s24 = sphi 0, %s21
      %s25 = sphi 0, %s22
      %s26 = sphi 0, %s23
      %s48 = sphi 0, %s50
      %s51 = sphi 0, %s48
      %s52 = sphi 0, %s51
      %s68 = sphi 0, %s52
      %s82 = sphi 0, %s84
      %s85 = sphi 0, %s82
      %s86 = sphi 0, %s85
      %s102 = sphi 0, %s86
      %s110 = sphi 0, %s112
      %s113 = sphi 0, %s110
      %s114 = sphi 0, %s113
      %s130 = sphi 0, %s114
    $region4: #{tpu_custom_call.1} parent=1 // loop_header_branch
      %14 = sbr.rel (%p12) target = $region8
    $region5: #{tpu_custom_call.1} parent=1 // loop_body
      %s16 = ssub.s32 %s11, 1
      %s17 = ssub.s32 %s11, 2
      %s27 = sadd.s32 1, %s20
      %p28 = scmp.ge.s32.totalorder %s27, 1
      %s29 = scalar_select %p28, 0, %s27
      %s30 = sadd.s32 1, %s19
      %s31 = scalar_select %p28, %s30, %s19
      %p32 = scmp.ge.s32.totalorder %s31, 1
      %s33 = scalar_select %p32, 0, %s31
      %s34 = sadd.s32 1, %s18
      %s35 = scalar_select %p32, %s34, %s18
      %p36 = scmp.ge.s32.totalorder %s35, 2
      %s37 = scalar_select %p36, 0, %s35
      %s38 = sadd.s32 %s19, %s20
      %p39 = scmp.lt.s32.totalorder %s38, 0
      %s40 = scalar_select %p39, %s38, 0
      %s41 = sadd.s32 %s33, %s29
      %p42 = scmp.lt.s32.totalorder %s41, 0
      %s43 = scalar_select %p42, %s41, 0
      %s44 = ssub.s32 %s18, %s37
      %s45 = ssub.s32 %s40, %s43
      %s46 = sor.u32 %s44, %s45
      %p47 = scmp.eq.s32.totalorder %s46, 0
      %s49 = sadd.s32 %s48, 1
      %s50 = scalar_select %p47, %s48, %s49
      %p53 = pneg %p47
      %p54 = scmp.eq.s32.totalorder %s11, 1
      %p55 = por %p53, %p54
      %p56 = scmp.ne.s32.totalorder %s48, %s51
      %p57 = scmp.eq.s32.totalorder %s11, 0
      %p58 = por %p56, %p57
      %p59 = scmp.ne.s32.totalorder %s48, %s51
      %p60 = scmp.eq.s32.totalorder %s16, 1
      %p61 = por %p59, %p60
      %p62 = scmp.ne.s32.totalorder %s51, %s52
      %p63 = scmp.eq.s32.totalorder %s16, 0
      %p64 = por %p62, %p63
      %p65 = scmp.ne.s32.totalorder %s51, %s52
      %p66 = scmp.eq.s32.totalorder %s17, 1
      %p67 = por %p65, %p66
      %p69 = scmp.ne.s32.totalorder %s52, %s68
      %p70 = scmp.eq.s32.totalorder %s17, 0
      %p71 = por %p69, %p70
      %s72 = sadd.s32 %s19, %s20
      %p73 = scmp.lt.s32.totalorder %s72, 0
      %s74 = scalar_select %p73, %s72, 0
      %s75 = sadd.s32 %s33, %s29
      %p76 = scmp.lt.s32.totalorder %s75, 0
      %s77 = scalar_select %p76, %s75, 0
      %s78 = ssub.s32 %s18, %s37
      %s79 = ssub.s32 %s74, %s77
      %s80 = sor.u32 %s78, %s79
      %p81 = scmp.eq.s32.totalorder %s80, 0
      %s83 = sadd.s32 %s82, 1
      %s84 = scalar_select %p81, %s82, %s83
      %p87 = pneg %p81
      %p88 = scmp.eq.s32.totalorder %s11, 1
      %p89 = por %p87, %p88
      %p90 = scmp.ne.s32.totalorder %s82, %s85
      %p91 = scmp.eq.s32.totalorder %s11, 0
      %p92 = por %p90, %p91
      %p93 = scmp.ne.s32.totalorder %s82, %s85
      %p94 = scmp.eq.s32.totalorder %s16, 1
      %p95 = por %p93, %p94
      %p96 = scmp.ne.s32.totalorder %s85, %s86
      %p97 = scmp.eq.s32.totalorder %s16, 0
      %p98 = por %p96, %p97
      %p99 = scmp.ne.s32.totalorder %s85, %s86
      %p100 = scmp.eq.s32.totalorder %s17, 1
      %p101 = por %p99, %p100
      %p103 = scmp.ne.s32.totalorder %s86, %s102
      %p104 = scmp.eq.s32.totalorder %s17, 0
      %p105 = por %p103, %p104
      %s106 = ssub.s32 %s18, %s37
      %s107 = ssub.s32 %s19, %s33
      %s108 = sor.u32 %s106, %s107
      %p109 = scmp.eq.s32.totalorder %s108, 0
      %s111 = sadd.s32 %s110, 1
      %s112 = scalar_select %p109, %s110, %s111
      %p115 = pneg %p109
      %p116 = scmp.eq.s32.totalorder %s11, 1
      %p117 = por %p115, %p116
      %p118 = scmp.ne.s32.totalorder %s110, %s113
      %p119 = scmp.eq.s32.totalorder %s11, 0
      %p120 = por %p118, %p119
      %p121 = scmp.ne.s32.totalorder %s110, %s113
      %p122 = scmp.eq.s32.totalorder %s16, 1
      %p123 = por %p121, %p122
      %p124 = scmp.ne.s32.totalorder %s113, %s114
      %p125 = scmp.eq.s32.totalorder %s16, 0
      %p126 = por %p124, %p125
      %p127 = scmp.ne.s32.totalorder %s113, %s114
      %p128 = scmp.eq.s32.totalorder %s17, 1
      %p129 = por %p127, %p128
      %p131 = scmp.ne.s32.totalorder %s114, %s130
      %p132 = scmp.eq.s32.totalorder %s17, 0
      %p133 = por %p131, %p132
      %p134 = scmp.le.s32.totalorder 1, %s11
      %p135 = scmp.lt.s32.totalorder %s11, 3
      %p136 = pnand %p134, %p135
      %p137 = pneg %p136
      // Predicated region
      $region9: #{tpu_custom_call.1} parent=5 // pred_check
        _
      $region10: #{tpu_custom_call.1} parent=5 // pred_check_branch
        %139 = sbr.rel (%p136) target = $region12
      $region11: #{tpu_custom_call.1} parent=5 // pred_region
        %s140 = ssub.s32 %s11, 1
      $region12: #{tpu_custom_call.1} parent=5 // pred_fallthru
        _
      %p141 = scmp.lt.s32.totalorder %s11, 2
      // Predicated region
      $region13: #{tpu_custom_call.1} parent=5 // pred_check
        %p142 = pneg %p141
      $region14: #{tpu_custom_call.1} parent=5 // pred_check_branch
        %144 = sbr.rel (%p142) target = $region16
      $region15: #{tpu_custom_call.1} parent=5 // pred_region
        // Predicated region
        $region17: #{tpu_custom_call.1} parent=15 // pred_check
          %p145 = pneg %p58
        $region18: #{tpu_custom_call.1} parent=15 // pred_check_branch
          %147 = sbr.rel (%p145) target = $region20
        $region19: #{tpu_custom_call.1} parent=15 // pred_region
          %s148 = sand.u32 %s48, 1
          %s149 = scalar_lea.sflag [#allocation3], %s148
          %s150 = sand.u32 %s48, 1
          %s151 = smul.addr %s150, 8
          %s152 = scalar_lea.vmem [#allocation2], %s151
          %s153 = sadd.s32 %s19, %s20
          %p154 = scmp.lt.s32.totalorder %s153, 0
          %s155 = scalar_select %p154, %s153, 0
          %s156 = smul.u32 2, %s155
          %s158 = ssub.s32 128, 128
          %159 = vsyncadd %s149, %s158
          %s160 = smul.addr %s18, 2
          %s161 = sadd.s32 %s156, %s160
          %s162 = smul.addr %s161, 64
          %s163 = scalar_lea.hbm %s0, %s162
          %s165 = sshll.u32 %s152, 4
          %s166 = int_to_ptr.vmem [resolvable:$true] %s165
          %168 = dma.hbm_to_vmem [thread:$0]  %s163, 128, %s166, %s149
        $region20: #{tpu_custom_call.1} parent=15 // pred_fallthru
          _
        // Predicated region
        $region21: #{tpu_custom_call.1} parent=15 // pred_check
          %p169 = pneg %p92
        $region22: #{tpu_custom_call.1} parent=15 // pred_check_branch
          %171 = sbr.rel (%p169) target = $region24
        $region23: #{tpu_custom_call.1} parent=15 // pred_region
          %s172 = sadd.s32 %s19, %s20
          %p173 = scmp.lt.s32.totalorder %s172, 0
          %s174 = scalar_select %p173, %s172, 0
          %s175 = smul.u32 2, %s174
          %p176 = scmp.lt.s32.totalorder %s18, 1
          %s177 = scalar_select %p176, %s18, 1
          %p178 = scmp.lt.s32.totalorder %s175, 1
          %s179 = scalar_select %p178, %s175, 1
          %s180 = smul.addr %s177, 2
          %s181 = sadd.s32 %s179, %s180
          %s182 = scalar_lea.vmem %s1, %s181
          %s183 = sadd.s32 %s19, %s20
          %p184 = scmp.lt.s32.totalorder %s183, 0
          %s185 = scalar_select %p184, %s183, 0
          %s186 = smul.u32 2, %s185
        $region24: #{tpu_custom_call.1} parent=15 // pred_fallthru
          _
      $region16: #{tpu_custom_call.1} parent=5 // pred_fallthru
        _
      %p187 = scmp.le.s32.totalorder 1, %s11
      %p188 = scmp.lt.s32.totalorder %s11, 3
      %p189 = pnand %p187, %p188
      %p190 = pneg %p189
      // Predicated region
      $region25: #{tpu_custom_call.1} parent=5 // pred_check
        _
      $region26: #{tpu_custom_call.1} parent=5 // pred_check_branch
        %192 = sbr.rel (%p189) target = $region28
      $region27: #{tpu_custom_call.1} parent=5 // pred_region
        %s193 = ssub.s32 %s11, 1
        %s194 = sand.u32 %s51, 1
        %s195 = scalar_lea.sflag [#allocation3], %s194
        %s196 = sand.u32 %s51, 1
        %s197 = smul.addr %s196, 8
        %s198 = scalar_lea.vmem [#allocation2], %s197
        // Predicated region
        $region29: #{tpu_custom_call.1} parent=27 // pred_check
          %p199 = pneg %p64
        $region30: #{tpu_custom_call.1} parent=27 // pred_check_branch
          %201 = sbr.rel (%p199) target = $region32
        $region31: #{tpu_custom_call.1} parent=27 // pred_region
          %202 = dma.done %s195, 128
        $region32: #{tpu_custom_call.1} parent=27 // pred_fallthru
          _
        %s203 = sand.u32 %s51, 1
        %s204 = scalar_lea.sflag [#allocation3], %s203
        %s205 = sand.u32 %s51, 1
        %s206 = smul.addr %s205, 8
        %s207 = scalar_lea.vmem [#allocation2], %s206
        %p208 = pneg %p64
        %p209 = pneg %p61
        %s210 = sadd.s32 %s22, %s23
        %p211 = scmp.lt.s32.totalorder %s210, 0
        %s212 = scalar_select %p211, %s210, 0
        %s213 = smul.u32 2, %s212
        %p214 = scmp.lt.s32.totalorder %s21, 1
        %s215 = scalar_select %p214, %s21, 1
        %p216 = scmp.lt.s32.totalorder %s213, 1
        %s217 = scalar_select %p216, %s213, 1
        %s218 = smul.addr %s215, 2
        %s219 = sadd.s32 %s217, %s218
        %s220 = scalar_lea.vmem %s1, %s219
        %p221 = pneg %p98
        %p222 = pneg %p95
        %p223 = pneg %p126
        %p224 = pneg %p123
        %p225 = scmp.lt.s32.totalorder %s21, 1
        %s226 = scalar_select %p225, %s21, 1
        %p227 = scmp.lt.s32.totalorder %s22, 0
        %s228 = scalar_select %p227, %s22, 0
        %s229 = sadd.s32 %s228, %s226
        %s230 = smul.addr %s229, 4
        %s231 = scalar_lea.vmem %s2, %s230
        %s232 = sadd.s32 %s22, %s23
        %p233 = scmp.lt.s32.totalorder %s232, 0
        %s234 = scalar_select %p233, %s232, 0
        %s235 = smul.u32 2, %s234
        %s236 = sadd.s32 %s22, %s23
        %p237 = scmp.lt.s32.totalorder %s236, 0
        %s238 = scalar_select %p237, %s236, 0
        %s239 = smul.u32 2, %s238
        %p240 = scmp.lt.s32.totalorder %s21, 1
        %s241 = scalar_select %p240, %s21, 1
        %p242 = scmp.lt.s32.totalorder %s239, 1
        %s243 = scalar_select %p242, %s239, 1
        %s244 = smul.addr %s241, 2
        %s245 = sadd.s32 %s243, %s244
        %s246 = scalar_lea.vmem %s1, %s245
        %s247 = sadd.s32 %s22, %s23
        %p248 = scmp.lt.s32.totalorder %s247, 0
        %s249 = scalar_select %p248, %s247, 0
        %s250 = smul.u32 2, %s249
        %p251 = scmp.lt.s32.totalorder %s21, 1
        %s252 = scalar_select %p251, %s21, 1
        %p253 = scmp.lt.s32.totalorder %s22, 0
        %s254 = scalar_select %p253, %s22, 0
        %s255 = sadd.s32 %s254, %s252
        %s256 = smul.addr %s255, 4
        %s257 = scalar_lea.vmem %s2, %s256
        %p258 = scmp.eq.s32.totalorder %s23, 0
        // Predicated region
        $region33: #{tpu_custom_call.1} parent=27 // pred_check
          %p259 = pneg %p258
        $region34: #{tpu_custom_call.1} parent=27 // pred_check_branch
          %261 = sbr.rel (%p259) target = $region36
        $region35: #{tpu_custom_call.1} parent=27 // pred_region
          %vm262 = vcmask 19456
          %263 = vst.msk [vmem:[%s257] sm:$0xf] %vm262, 0.0
        $region36: #{tpu_custom_call.1} parent=27 // pred_fallthru
          _
        %v264 = vld [vmem:[%s198] sm:$0xff]
        %v265 = vld [vmem:[%s246] sm:$0x3]
        %v266 = vunpack.c.l.b16 %v265
        %s267 = sadd.s32 %s22, %s23
        %s268 = smul.u32 %s267, 256
        %v269 = vlaneseq
        %v270 = vand.u32 %v269, 127
        %v271 = vadd.s32 %v270, 128
        %v272 = vstv %s268
        %v273 = vadd.s32 %v272, %v270
        %v274 = vadd.s32 %v272, %v271
        %vm275 = vcmp.lt.s32.totalorder %v273, 256
        %vm276 = vcmp.lt.s32.totalorder %v274, 256
        %v277 = vlaneseq
        %v278 = vshrl.u32 %v277, 7
        %v279 = vsub.s32 0, %v278
        %v280 = vrot.slane %v266, %v279
        %v281 = vlaneseq
        %v282 = vshrl.u32 %v281, 7
        %v283 = vsub.s32 2, %v282
        %v284 = vrot.slane %v266, %v283
        %v285 = vsel %vm275, %v280, 4294967295
        %v286 = vsel %vm276, %v284, 4294967295
        %vm287 = vcmp.ne.s32.totalorder %v266, 255
        %v288 = vsel %vm287, 1, 0
        %v289 = vlaneseq
        %v290 = vshrl.u32 %v289, 7
        %v291 = vsub.s32 0, %v290
        %v292 = vrot.slane %v288, %v291
        %v293 = vlaneseq
        %v294 = vshrl.u32 %v293, 7
        %v295 = vsub.s32 2, %v294
        %v296 = vrot.slane %v288, %v295
        %vm297 = vcmp.ne.s32.totalorder %v292, 0
        %vm298 = vcmp.ne.s32.totalorder %v296, 0
        %vm299 = vmand %vm275, %vm297
        %vm300 = vmand %vm276, %vm298
        %v301 = vlaneseq
        %v302 = vshrl.u32 %v301, 7
        %v303 = vlaneseq
        %v304 = vshrl.u32 %v303, 7
        %v305 = vsub.s32 0, %v304
        %v306 = vrot.slane %v285, %v305
        %v307 = vlaneseq
        %v308 = vshrl.u32 %v307, 7
        %v309 = vsub.s32 0, %v308
        %v310 = vrot.slane %v286, %v309
        %vm311 = vcmp.eq.s32.totalorder %v302, %v306
        %vm312 = vcmp.eq.s32.totalorder %v302, %v310
        %v313 = vsel %vm311, 1, 0
        %v314 = vsel %vm312, 1, 0
        %v315 = vcvt.s32.f32 %v313
        %v316 = vcvt.s32.f32 %v314
        %v318 = vcombine.high %v264, %v264
        %vm320 = vcmask 1043456
        %v321 = vsel %vm320, %v264, -inf
        %v322 = vrot.slane %v321, 4
        %v323 = vmax.f32 %v321, %v322
        %v324 = vrot.slane %v323, 2
        %v325 = vmax.f32 %v323, %v324
        %v326 = vrot.slane %v325, 1
        %v327 = vmax.f32 %v325, %v326
        %v328 = vsel %vm320, %v318, -inf
        %v329 = vrot.slane %v328, 4
        %v330 = vmax.f32 %v328, %v329
        %v331 = vrot.slane %v330, 2
        %v332 = vmax.f32 %v330, %v331
        %v333 = vrot.slane %v332, 1
        %v334 = vmax.f32 %v332, %v333
        %v337 = vcombine.low %v327, %v334
        %v339 = vsub.f32 %v264, %v337
        %v340 = vmul.f32 %v339, 1.442695
        %v341 = vpow.pop %v340
        %v343 = vcombine.high %v341, %v341
        %v345 = vsel %vm320, %v341, 0.0
        %v346 = vrot.slane %v345, 4
        %v347 = vadd.f32 %v345, %v346
        %v348 = vrot.slane %v347, 2
        %v349 = vadd.f32 %v347, %v348
        %v350 = vrot.slane %v349, 1
        %v351 = vadd.f32 %v349, %v350
        %v352 = vsel %vm320, %v343, 0.0
        %v353 = vrot.slane %v352, 4
        %v354 = vadd.f32 %v352, %v353
        %v355 = vrot.slane %v354, 2
        %v356 = vadd.f32 %v354, %v355
        %v357 = vrot.slane %v356, 1
        %v358 = vadd.f32 %v356, %v357
        %v359 = vlog2.pop %v351
        %v360 = vmul.f32 %v359, 0.6931472
        %v361 = vlog2.pop %v358
        %v362 = vmul.f32 %v361, 0.6931472
        %v363 = vadd.f32 %v360, %v327
        %v364 = vadd.f32 %v362, %v334
        %v365 = vsel %vm311, %v264, 0.0
        %v366 = vsel %vm312, %v318, 0.0
        %v367 = vsel %vm320, %v365, 0.0
        %v368 = vrot.slane %v367, 4
        %v369 = vadd.f32 %v367, %v368
        %v370 = vrot.slane %v369, 2
        %v371 = vadd.f32 %v369, %v370
        %v372 = vrot.slane %v371, 1
        %v373 = vadd.f32 %v371, %v372
        %v374 = vsel %vm320, %v366, 0.0
        %v375 = vrot.slane %v374, 4
        %v376 = vadd.f32 %v374, %v375
        %v377 = vrot.slane %v376, 2
        %v378 = vadd.f32 %v376, %v377
        %v379 = vrot.slane %v378, 1
        %v380 = vadd.f32 %v378, %v379
        %v381 = vsub.f32 %v363, %v373
        %v382 = vsub.f32 %v364, %v380
        %v383 = vsel %vm299, %v381, 0.0
        %v384 = vsel %vm300, %v382, 0.0
        %v385 = vsel %vm299, 1, 0
        %v386 = vsel %vm300, 1, 0
        %v387 = vcvt.s32.f32 %v385
        %v388 = vcvt.s32.f32 %v386
        %v391 = vrot.slane %v387, 7
        %v392 = vrot.slane %v388, 7
        %v397 = vrot.slane %v383, 6
        %v398 = vrot.slane %v384, 6
        %vm401 = vcmask 1040384
        %v402 = vsel %vm401, 1.0, %v391
        %v403 = vsel %vm401, 1.0, %v392
        %vm404 = vcmask 1041408
        %v405 = vsel %vm404, %v402, %v397
        %v406 = vsel %vm404, %v403, %v398
        %407 = vmatprep.subr.mxu0 %v406
        %408 = vmatpush1.xpose.msra.mxu0 %v405
        %409 = vmatprep.subr.mxu0 0.0
        %410 = vmatpush1.xpose.msra.mxu0 0.0
        %411 = vmatprep.subr.mxu0 0.0
        %412 = vmatpush1.xpose.msra.mxu0 0.0
        %413 = vmatprep.subr.mxu0 0.0
        %414 = vmatpush1.xpose.msra.mxu0 0.0
        %415 = vmatprep.subr.mxu0 0.0
        %416 = vmatpush1.xpose.msra.mxu0 0.0
        %417 = vmatprep.subr.mxu0 0.0
        %418 = vmatpush1.xpose.msra.mxu0 0.0
        %419 = vmatprep.subr.mxu0 0.0
        %420 = vmatpush1.xpose.msra.mxu0 0.0
        %421 = vmatprep.subr.mxu0 0.0
        %422 = vmatpush1.xpose.msra.mxu0 0.0
        %423 = vmatprep.subr.mxu0 0.0
        %424 = vmatpush1.xpose.msra.mxu0 0.0
        %425 = vmatprep.subr.mxu0 0.0
        %426 = vmatpush1.xpose.msra.mxu0 0.0
        %427 = vmatprep.subr.mxu0 0.0
        %428 = vmatpush1.xpose.msra.mxu0 0.0
        %429 = vmatprep.subr.mxu0 0.0
        %430 = vmatpush1.xpose.msra.mxu0 0.0
        %431 = vmatprep.subr.mxu0 0.0
        %432 = vmatpush1.xpose.msra.mxu0 0.0
        %433 = vmatprep.subr.mxu0 0.0
        %434 = vmatpush1.xpose.msra.mxu0 0.0
        %435 = vmatprep.subr.mxu0 0.0
        %436 = vmatpush1.xpose.msra.mxu0 0.0
        %437 = vmatprep.subr.mxu0 0.0
        %438 = vmatpush1.xpose.msra.mxu0 0.0
        %439 = vmatprep.subr.mxu0 0.0
        %440 = vmatpush1.xpose.msra.mxu0 0.0
        %441 = vmatprep.subr.mxu0 0.0
        %442 = vmatpush1.xpose.msra.mxu0 0.0
        %443 = vmatprep.subr.mxu0 0.0
        %444 = vmatpush1.xpose.msra.mxu0 0.0
        %445 = vmatprep.subr.mxu0 0.0
        %446 = vmatpush1.xpose.msra.mxu0 0.0
        %447 = vmatprep.subr.mxu0 0.0
        %448 = vmatpush1.xpose.msra.mxu0 0.0
        %449 = vmatprep.subr.mxu0 0.0
        %450 = vmatpush1.xpose.msra.mxu0 0.0
        %451 = vmatprep.subr.mxu0 0.0
        %452 = vmatpush1.xpose.msra.mxu0 0.0
        %453 = vmatprep.subr.mxu0 0.0
        %454 = vmatpush1.xpose.msra.mxu0 0.0
        %455 = vmatprep.subr.mxu0 0.0
        %456 = vmatpush1.xpose.msra.mxu0 0.0
        %457 = vmatprep.subr.mxu0 0.0
        %458 = vmatpush1.xpose.msra.mxu0 0.0
        %459 = vmatprep.subr.mxu0 0.0
        %460 = vmatpush1.xpose.msra.mxu0 0.0
        %461 = vmatprep.subr.mxu0 0.0
        %462 = vmatpush1.xpose.msra.mxu0 0.0
        %463 = vmatprep.subr.mxu0 0.0
        %464 = vmatpush1.xpose.msra.mxu0 0.0
        %465 = vmatprep.subr.mxu0 0.0
        %466 = vmatpush1.xpose.msra.mxu0 0.0
        %467 = vmatprep.subr.mxu0 0.0
        %468 = vmatpush1.xpose.msra.mxu0 0.0
        %469 = vmatprep.subr.mxu0 0.0
        %470 = vmatpush1.xpose.msra.mxu0 0.0
        %471 = vmatprep.mubr.f32.mxu0 %v316
        %472 = vmatmul.mubr.f32.gmra.mrb[0].mxu0 %v315
        %v473 = vpop.f32.mrb[0].mxu0
        %v474 = vadd.f32 0.0, %v473
        %v475 = vpop.f32.mrb[0].mxu0
        %476 = vdwg.mxu0
        %v477 = vld [vmem:[%s257] sm:$0xf]
        %v478 = vadd.f32 %v477, %v474
        %vm479 = vcmask 19456
        %480 = vst.msk [vmem:[%s257] sm:$0xf] %vm479, %v478
        %p481 = scmp.lt.s32.totalorder %s21, 1
        %s482 = scalar_select %p481, %s21, 1
        %p483 = scmp.lt.s32.totalorder %s22, 0
        %s484 = scalar_select %p483, %s22, 0
        %s485 = sadd.s32 %s484, %s482
        %s486 = smul.addr %s485, 4
        %s487 = scalar_lea.vmem %s2, %s486
        // Predicated region
        $region37: #{tpu_custom_call.1} parent=27 // pred_check
          %p488 = pneg %p123
        $region38: #{tpu_custom_call.1} parent=27 // pred_check_branch
          %490 = sbr.rel (%p488) target = $region40
        $region39: #{tpu_custom_call.1} parent=27 // pred_region
          _
        $region40: #{tpu_custom_call.1} parent=27 // pred_fallthru
          _
      $region28: #{tpu_custom_call.1} parent=5 // pred_fallthru
        _
      %p491 = scmp.le.s32.totalorder 2, %s11
      // Predicated region
      $region41: #{tpu_custom_call.1} parent=5 // pred_check
        %p492 = pneg %p491
      $region42: #{tpu_custom_call.1} parent=5 // pred_check_branch
        %494 = sbr.rel (%p492) target = $region44
      $region43: #{tpu_custom_call.1} parent=5 // pred_region
        %s495 = ssub.s32 %s11, 2
        // Predicated region
        $region45: #{tpu_custom_call.1} parent=43 // pred_check
          %p496 = pneg %p129
        $region46: #{tpu_custom_call.1} parent=43 // pred_check_branch
          %498 = sbr.rel (%p496) target = $region48
        $region47: #{tpu_custom_call.1} parent=43 // pred_region
          %p499 = scmp.lt.s32.totalorder %s24, 1
          %s500 = scalar_select %p499, %s24, 1
          %p501 = scmp.lt.s32.totalorder %s25, 0
          %s502 = scalar_select %p501, %s25, 0
          %s503 = sadd.s32 %s502, %s500
          %s504 = smul.addr %s503, 4
          %s505 = scalar_lea.vmem %s2, %s504
        $region48: #{tpu_custom_call.1} parent=43 // pred_fallthru
          _
      $region44: #{tpu_custom_call.1} parent=5 // pred_fallthru
        _
    $region6: #{tpu_custom_call.1} parent=1 // loop_footer
      %s15 = sadd.s32 1, %s11
    $region7: #{tpu_custom_call.1} parent=1 // loop_footer_branch
      %10 = sbr.rel target = $region3
    $region8: #{tpu_custom_call.1} parent=1 // loop_exit
      _
    %506 = vsyncpa [#allocation3], 1
    %s507 = scalar_lea.sflag [#allocation3], 1
    %508 = vsyncpa %s507, 1

</llo_original>
